<compile_context>
chip_gen: v6e
topology: v6e:2x2x1
jax: 0.10.0
libtpu: 0.0.40
codegen_flags: <defaults>
</compile_context>

<pallas_src>
import jax
import jax.numpy as jnp
from jax.experimental import pallas as pl
from jax.experimental.pallas import tpu as pltpu

# Logical (PyTorch) sizes and lane-padded sizes.
IN_F, H1, H2, H3, OUT_F = 515, 100, 50, 5, 2
IN_P = 640          # 5 * 128 (padded contraction dim for fc1)
H_P = 128           # all hidden / output dims padded to one lane width
N_STACKED = 3       # w2, w3, w4 stacked


def mlp_kernel(x_ref, w1_ref, wr_ref, b_ref, o_ref, xp_ref):
    """x:(TM,515)f32  w1:(640,128)bf16  wr:(3,128,128)bf16  b:(4,128)f32  o:(TM,128)f32."""
    # In-kernel zero-pad of the feature dim 515 -> 640 so the MXU sees an
    # aligned K.  Pad lanes are zero, so the math is unchanged (zero rows in
    # w1 / zero hidden columns contribute nothing, ReLU(0) = 0).
    xp_ref[...] = jnp.zeros_like(xp_ref)
    xp_ref[:, :IN_F] = x_ref[...]

    b = b_ref[...]                                   # (4,128) f32, kept in vregs
    x = xp_ref[...].astype(jnp.bfloat16)             # bf16 MXU inputs, f32 accumulate

    # fc1 + relu
    h = jnp.dot(x, w1_ref[...], preferred_element_type=jnp.float32)
    h = jnp.maximum(h + b[0:1, :], 0.0)
    # fc2 + relu
    h = jnp.dot(h.astype(jnp.bfloat16), wr_ref[0], preferred_element_type=jnp.float32)
    h = jnp.maximum(h + b[1:2, :], 0.0)
    # fc3 + relu
    h = jnp.dot(h.astype(jnp.bfloat16), wr_ref[1], preferred_element_type=jnp.float32)
    h = jnp.maximum(h + b[2:3, :], 0.0)
    # out (no activation)
    h = jnp.dot(h.astype(jnp.bfloat16), wr_ref[2], preferred_element_type=jnp.float32)
    o_ref[...] = (h + b[3:4, :]).astype(o_ref.dtype)


def prepare_params(params):
    """One-time packing: padded bf16 weights (w1 separate, w2/w3/w4 stacked) + stacked f32 biases."""
    (w1, b1), (w2, b2), (w3, b3), (w4, b4) = params

    w1p = jnp.zeros((IN_P, H_P), jnp.bfloat16).at[:IN_F, :H1].set(w1.astype(jnp.bfloat16))

    def pad_w(w):
        return jnp.zeros((H_P, H_P), jnp.bfloat16).at[:w.shape[0], :w.shape[1]].set(
            w.astype(jnp.bfloat16))

    w_rest = jnp.stack([pad_w(w2), pad_w(w3), pad_w(w4)])          # (3,128,128) bf16

    def pad_b(b):
        return jnp.zeros((H_P,), jnp.float32).at[:b.size].set(
            b.reshape(-1).astype(jnp.float32))

    biases = jnp.stack([pad_b(b1), pad_b(b2), pad_b(b3), pad_b(b4)])  # (4,128) f32
    return w1p, w_rest, biases


def mlp_forward(x, w1p, w_rest, biases):
    batch = x.shape[0]
    # Row tile: multiple of 8 sublanes, up to 128 rows per grid step.
    tm = 128 if batch >= 128 else max(8, ((batch + 7) // 8) * 8)
    batch_p = ((batch + tm - 1) // tm) * tm
    if batch_p != batch:
        x = jnp.pad(x, ((0, batch_p - batch), (0, 0)))
    grid = (batch_p // tm,)

    flops = 2 * batch_p * (IN_P * H_P + N_STACKED * H_P * H_P)
    bytes_accessed = (batch_p * IN_F * 4 + w1p.size * 2 + w_rest.size * 2
                      + biases.size * 4 + batch_p * H_P * 4)
    cost = pl.CostEstimate(flops=flops, transcendentals=0, bytes_accessed=bytes_accessed)

    out_p = pl.pallas_call(
        mlp_kernel,
        out_shape=jax.ShapeDtypeStruct((batch_p, H_P), jnp.float32),
        grid_spec=pltpu.PrefetchScalarGridSpec(
            num_scalar_prefetch=0,
            grid=grid,
            in_specs=[
                pl.BlockSpec((tm, IN_F), lambda i: (i, 0)),               # x tile (pipelined)
                pl.BlockSpec((IN_P, H_P), lambda i: (0, 0)),              # w1 (resident)
                pl.BlockSpec((N_STACKED, H_P, H_P), lambda i: (0, 0, 0)), # w2/w3/w4 (resident)
                pl.BlockSpec((4, H_P), lambda i: (0, 0)),                 # biases (resident)
            ],
            out_specs=pl.BlockSpec((tm, H_P), lambda i: (i, 0)),
            scratch_shapes=[pltpu.VMEM((tm, IN_P), jnp.float32)],         # padded-x staging
        ),
        compiler_params=pltpu.CompilerParams(dimension_semantics=("parallel",)),
        cost_estimate=cost,
    )(x, w1p, w_rest, biases)

    # TODO(synk): if the consumer accepts a lane-dense (batch,128) result, return
    # out_p directly and drop this slice (padded columns 2..127 are exactly bias-pad=0+w-pad=0).
    return out_p[:batch, :OUT_F]


def init_linear(key, in_f, out_f):
    """Deterministic init matching nn.Linear's uniform(-1/sqrt(in), 1/sqrt(in)) scheme."""
    kw, kb = jax.random.split(key)
    bound = 1.0 / jnp.sqrt(jnp.float32(in_f))
    w = jax.random.uniform(kw, (in_f, out_f), jnp.float32, -bound, bound)  # (in,out): x @ W
    b = jax.random.uniform(kb, (1, out_f), jnp.float32, -bound, bound)
    return w, b


def reference_forward_f32(x, params):
    """Pure f32 reference (original PyTorch module semantics)."""
    h = x
    for i, (w, b) in enumerate(params):
        h = h @ w + b
        if i < len(params) - 1:
            h = jnp.maximum(h, 0.0)
    return h


def reference_forward_bf16(x, params):
    """Reference with the same bf16 quantization of MXU inputs as the kernel (tight check)."""
    h = x.astype(jnp.bfloat16)
    for i, (w, b) in enumerate(params):
        h = jnp.dot(h, w.astype(jnp.bfloat16), preferred_element_type=jnp.float32)
        h = h + b.reshape(1, -1).astype(jnp.float32)
        if i < len(params) - 1:
            h = jnp.maximum(h, 0.0).astype(jnp.bfloat16)
    return h


if __name__ == "__main__":
    batch = 8

    root = jax.random.PRNGKey(0)
    kx, k1, k2, k3, k4 = jax.random.split(root, 5)

    x = jax.random.normal(kx, (batch, IN_F), jnp.float32)
    params = [
        init_linear(k1, IN_F, H1),
        init_linear(k2, H1, H2),
        init_linear(k3, H2, H3),
        init_linear(k4, H3, OUT_F),
    ]
    w1p, w_rest, biases = prepare_params(params)

    fwd = jax.jit(mlp_forward)

    y = jax.block_until_ready(fwd(x, w1p, w_rest, biases))
    assert y.shape == (batch, OUT_F)

    # Tight check vs an identically-quantized (bf16-input) JAX reference.
    y_bf16_ref = reference_forward_bf16(x, params)
    assert jnp.allclose(y, y_bf16_ref, atol=2e-3, rtol=2e-3), \
        f"max abs diff vs bf16 ref: {jnp.max(jnp.abs(y - y_bf16_ref))}"

    # Loose check vs the full-f32 reference (bf16 inputs quantize ~0.4%/layer).
    y_f32_ref = reference_forward_f32(x, params)
    assert jnp.allclose(y, y_f32_ref, atol=5e-2, rtol=5e-2), \
        f"max abs diff vs f32 ref: {jnp.max(jnp.abs(y - y_f32_ref))}"

    # Exercise the multi-step batch grid (weights resident across steps, batch axis parallel).
    x_big = jax.random.normal(kx, (256, IN_F), jnp.float32)
    y_big = jax.block_until_ready(fwd(x_big, w1p, w_rest, biases))
    assert y_big.shape == (256, OUT_F)
    y_big_ref = reference_forward_bf16(x_big, params)
    assert jnp.allclose(y_big, y_big_ref, atol=2e-3, rtol=2e-3), \
        f"max abs diff (batch=256) vs bf16 ref: {jnp.max(jnp.abs(y_big - y_big_ref))}"

    print("KERNEL_OK")
</pallas_src>

<mosaic_0001>
module attributes {stable_mosaic.version = 11 : i64} {
  func.func @mlp_kernel(%arg0: i32, %arg1: memref<8x515xf32, #tpu.memory_space<vmem>>, %arg2: memref<640x128xbf16, #tpu.memory_space<vmem>>, %arg3: memref<3x128x128xbf16, #tpu.memory_space<vmem>>, %arg4: memref<4x128xf32, #tpu.memory_space<vmem>>, %arg5: memref<8x128xf32, #tpu.memory_space<vmem>>, %arg6: memref<8x640xf32, #tpu.memory_space<vmem>>) attributes {dimension_semantics = [#tpu.dimension_semantics<parallel>], iteration_bounds = array<i64: 1>, scalar_prefetch = 0 : i64, scratch_operands = 1 : i64, tpu.core_type = #tpu.core_type<tc>, window_params = [{transform_indices = @transform_0, window_bounds = array<i64: 8, 515>}, {pipeline_mode = #tpu.pipeline_mode<synchronous>, transform_indices = @transform_1, window_bounds = array<i64: 640, 128>}, {pipeline_mode = #tpu.pipeline_mode<synchronous>, transform_indices = @transform_2, window_bounds = array<i64: 3, 128, 128>}, {pipeline_mode = #tpu.pipeline_mode<synchronous>, transform_indices = @transform_3, window_bounds = array<i64: 4, 128>}, {transform_indices = @transform_4, window_bounds = array<i64: 8, 128>}]} {
    %cst = arith.constant 0.000000e+00 : f32
    %0 = vector.broadcast %cst : f32 to vector<8x640xf32>
    %c0 = arith.constant 0 : index
    %c0_0 = arith.constant 0 : index
    %1 = vector.load %arg6[%c0, %c0_0] : memref<8x640xf32, #tpu.memory_space<vmem>>, vector<8x640xf32>
    tpu.vector_store %arg6[%c0, %c0_0], %0 {strides = array<i32>} : memref<8x640xf32, #tpu.memory_space<vmem>>, vector<8x640xf32>,
    %c0_1 = arith.constant 0 : index
    %c0_2 = arith.constant 0 : index
    %2 = vector.load %arg1[%c0_1, %c0_2] : memref<8x515xf32, #tpu.memory_space<vmem>>, vector<8x515xf32>
    %c0_3 = arith.constant 0 : index
    %c0_4 = arith.constant 0 : index
    %3 = vector.load %arg6[%c0_3, %c0_4] : memref<8x640xf32, #tpu.memory_space<vmem>>, vector<8x515xf32>
    tpu.vector_store %arg6[%c0_3, %c0_4], %2 {strides = array<i32>} : memref<8x640xf32, #tpu.memory_space<vmem>>, vector<8x515xf32>,
    %c0_5 = arith.constant 0 : index
    %c0_6 = arith.constant 0 : index
    %4 = vector.load %arg4[%c0_5, %c0_6] : memref<4x128xf32, #tpu.memory_space<vmem>>, vector<4x128xf32>
    %c0_7 = arith.constant 0 : index
    %c0_8 = arith.constant 0 : index
    %5 = vector.load %arg6[%c0_7, %c0_8] : memref<8x640xf32, #tpu.memory_space<vmem>>, vector<8x640xf32>
    %6 = arith.truncf %5 : vector<8x640xf32> to vector<8x640xbf16>
    %c0_9 = arith.constant 0 : index
    %c0_10 = arith.constant 0 : index
    %7 = vector.load %arg2[%c0_9, %c0_10] : memref<640x128xbf16, #tpu.memory_space<vmem>>, vector<640x128xbf16>
    %cst_11 = arith.constant dense<0.000000e+00> : vector<8x128xf32>
    %8 = tpu.matmul %6, %7, %cst_11 {dimension_numbers = #tpu.dot_dimension_numbers<[1], [0], [0], [1], [0, 0, 1, 1], [], []>} : vector<8x640xbf16>, vector<640x128xbf16>, vector<8x128xf32> -> vector<8x128xf32>
    %9 = vector.extract_strided_slice %4 {offsets = [0, 0], sizes = [1, 128], strides = [1, 1]} : vector<4x128xf32> to vector<1x128xf32>
    %10 = vector.broadcast %9 : vector<1x128xf32> to vector<8x128xf32>
    %11 = arith.addf %8, %10 : vector<8x128xf32>
    %cst_12 = arith.constant 0.000000e+00 : f32
    %12 = vector.broadcast %cst_12 : f32 to vector<8x128xf32>
    %13 = arith.maximumf %11, %12 : vector<8x128xf32>
    %14 = arith.truncf %13 : vector<8x128xf32> to vector<8x128xbf16>
    %c0_13 = arith.constant 0 : index
    %c0_14 = arith.constant 0 : index
    %c0_15 = arith.constant 0 : index
    %15 = vector.load %arg3[%c0_13, %c0_14, %c0_15] : memref<3x128x128xbf16, #tpu.memory_space<vmem>>, vector<1x128x128xbf16>
    %16 = vector.shape_cast %15 : vector<1x128x128xbf16> to vector<128x128xbf16>
    %cst_16 = arith.constant dense<0.000000e+00> : vector<8x128xf32>
    %17 = tpu.matmul %14, %16, %cst_16 {dimension_numbers = #tpu.dot_dimension_numbers<[1], [0], [0], [1], [0, 0, 1, 1], [], []>} : vector<8x128xbf16>, vector<128x128xbf16>, vector<8x128xf32> -> vector<8x128xf32>
    %18 = vector.extract_strided_slice %4 {offsets = [1, 0], sizes = [1, 128], strides = [1, 1]} : vector<4x128xf32> to vector<1x128xf32>
    %19 = vector.broadcast %18 : vector<1x128xf32> to vector<8x128xf32>
    %20 = arith.addf %17, %19 : vector<8x128xf32>
    %cst_17 = arith.constant 0.000000e+00 : f32
    %21 = vector.broadcast %cst_17 : f32 to vector<8x128xf32>
    %22 = arith.maximumf %20, %21 : vector<8x128xf32>
    %23 = arith.truncf %22 : vector<8x128xf32> to vector<8x128xbf16>
    %c1 = arith.constant 1 : index
    %c0_18 = arith.constant 0 : index
    %c0_19 = arith.constant 0 : index
    %24 = vector.load %arg3[%c1, %c0_18, %c0_19] : memref<3x128x128xbf16, #tpu.memory_space<vmem>>, vector<1x128x128xbf16>
    %25 = vector.shape_cast %24 : vector<1x128x128xbf16> to vector<128x128xbf16>
    %cst_20 = arith.constant dense<0.000000e+00> : vector<8x128xf32>
    %26 = tpu.matmul %23, %25, %cst_20 {dimension_numbers = #tpu.dot_dimension_numbers<[1], [0], [0], [1], [0, 0, 1, 1], [], []>} : vector<8x128xbf16>, vector<128x128xbf16>, vector<8x128xf32> -> vector<8x128xf32>
    %27 = vector.extract_strided_slice %4 {offsets = [2, 0], sizes = [1, 128], strides = [1, 1]} : vector<4x128xf32> to vector<1x128xf32>
    %28 = vector.broadcast %27 : vector<1x128xf32> to vector<8x128xf32>
    %29 = arith.addf %26, %28 : vector<8x128xf32>
    %cst_21 = arith.constant 0.000000e+00 : f32
    %30 = vector.broadcast %cst_21 : f32 to vector<8x128xf32>
    %31 = arith.maximumf %29, %30 : vector<8x128xf32>
    %32 = arith.truncf %31 : vector<8x128xf32> to vector<8x128xbf16>
    %c2 = arith.constant 2 : index
    %c0_22 = arith.constant 0 : index
    %c0_23 = arith.constant 0 : index
    %33 = vector.load %arg3[%c2, %c0_22, %c0_23] : memref<3x128x128xbf16, #tpu.memory_space<vmem>>, vector<1x128x128xbf16>
    %34 = vector.shape_cast %33 : vector<1x128x128xbf16> to vector<128x128xbf16>
    %cst_24 = arith.constant dense<0.000000e+00> : vector<8x128xf32>
    %35 = tpu.matmul %32, %34, %cst_24 {dimension_numbers = #tpu.dot_dimension_numbers<[1], [0], [0], [1], [0, 0, 1, 1], [], []>} : vector<8x128xbf16>, vector<128x128xbf16>, vector<8x128xf32> -> vector<8x128xf32>
    %36 = vector.extract_strided_slice %4 {offsets = [3, 0], sizes = [1, 128], strides = [1, 1]} : vector<4x128xf32> to vector<1x128xf32>
    %37 = vector.broadcast %36 : vector<1x128xf32> to vector<8x128xf32>
    %38 = arith.addf %35, %37 : vector<8x128xf32>
    %c0_25 = arith.constant 0 : index
    %c0_26 = arith.constant 0 : index
    %39 = vector.load %arg5[%c0_25, %c0_26] : memref<8x128xf32, #tpu.memory_space<vmem>>, vector<8x128xf32>
    tpu.vector_store %arg5[%c0_25, %c0_26], %38 {strides = array<i32>} : memref<8x128xf32, #tpu.memory_space<vmem>>, vector<8x128xf32>,
    return
  }
  func.func @transform_0(%arg0: i32) -> (i32, i32) {
    %c0_i32 = arith.constant 0 : i32
    %c0_i32_0 = arith.constant 0 : i32
    return %arg0, %c0_i32 : i32, i32
  }
  func.func @transform_1(%arg0: i32) -> (i32, i32) {
    %c0_i32 = arith.constant 0 : i32
    %c0_i32_0 = arith.constant 0 : i32
    %c0_i32_1 = arith.constant 0 : i32
    return %c0_i32, %c0_i32_0 : i32, i32
  }
  func.func @transform_2(%arg0: i32) -> (i32, i32, i32) {
    %c0_i32 = arith.constant 0 : i32
    %c0_i32_0 = arith.constant 0 : i32
    %c0_i32_1 = arith.constant 0 : i32
    %c0_i32_2 = arith.constant 0 : i32
    return %c0_i32, %c0_i32_0, %c0_i32_1 : i32, i32, i32
  }
  func.func @transform_3(%arg0: i32) -> (i32, i32) {
    %c0_i32 = arith.constant 0 : i32
    %c0_i32_0 = arith.constant 0 : i32
    %c0_i32_1 = arith.constant 0 : i32
    return %c0_i32, %c0_i32_0 : i32, i32
  }
  func.func @transform_4(%arg0: i32) -> (i32, i32) {
    %c0_i32 = arith.constant 0 : i32
    %c0_i32_0 = arith.constant 0 : i32
    return %arg0, %c0_i32 : i32, i32
  }
}

</mosaic_0001>

<llo_original>
// kernel: mlp_forward.1
$region0: #{mlp_forward.1}
  #allocation0 [shape = 'u32[]', space=smem, size = 0x4, offset = 0x4, fixed_abs, tag = 'smem constant byte address 0x4 - core index']
  #allocation1 [shape = 'u32[144,128]{1,0:T(1,128)}', space=vmem, size = 0x12000, scoped, tag = 'internal scratch']
  #allocation2 [shape = 'f32[8,640]{1,0:T(8,128)}', space=vmem, size = 0x5000, scoped, tag = 'scratch operand']
  %s0 = inlined_call_operand.hbm [shape: f32[8,515], index: 0, kind: input, shape index: {}]
  %s1 = inlined_call_operand.hbm [shape: bf16[640,128], index: 1, kind: input, shape index: {}]
  %s2 = inlined_call_operand.hbm [shape: bf16[3,128,128], index: 2, kind: input, shape index: {}]
  %s3 = inlined_call_operand.vmem [shape: f32[4,128], index: 3, kind: input, shape index: {}]
  %s4 = inlined_call_operand.vmem [shape: f32[8,128], index: 4, kind: output, shape index: {}]
  %s5 = sld [smem:[#allocation0]]
  $region38: #{mlp_forward.1} parent=0
    _
  %s7 = ssub.s32 1, %s5
  %s8 = scalar_select 0, %s7, %s5
  $region1: #{mlp_forward.1} parent=0
    #allocation3 [shape = 'u8[20480]{0}', space=vmem, size = 0x5000, scoped, tag = 'input window, operand 0, single buffered']
    #allocation4 [shape = 's32[1]{0}', space=sflag, size = 0x4, scoped, tag = 'scoped memory for mlp_forward.1']
    #allocation5 [shape = 'u8[163840]{0}', space=vmem, size = 0x28000, scoped, tag = 'input window, operand 1, single buffered']
    #allocation6 [shape = 's32[1]{0}', space=sflag, size = 0x4, scoped, tag = 'scoped memory for mlp_forward.1']
    #allocation7 [shape = 'u8[98304]{0}', space=vmem, size = 0x18000, scoped, tag = 'input window, operand 2, single buffered']
    %9 = vsyncpa [#allocation4], 0
    %10 = vsyncpa [#allocation6], 0
    // Predicated region
    $region2: #{mlp_forward.1} parent=1 // pred_check
      _
    $region3: #{mlp_forward.1} parent=1 // pred_check_branch
      %12 = sbr.rel (0) target = $region5
    $region4: #{mlp_forward.1} parent=1 // pred_region
      %s14 = ssub.s32 640, 640
      %15 = vsyncadd [#allocation4], %s14
      %s17 = sshll.u32 [#allocation3], 4
      %s18 = int_to_ptr.vmem [resolvable:$true] %s17
      %20 = dma.hbm_to_vmem [thread:$0]  %s0, 640, %s18, [#allocation4]
    $region5: #{mlp_forward.1} parent=1 // pred_fallthru
      _
    // Predicated region
    $region6: #{mlp_forward.1} parent=1 // pred_check
      _
    $region7: #{mlp_forward.1} parent=1 // pred_check_branch
      %22 = sbr.rel (0) target = $region9
    $region8: #{mlp_forward.1} parent=1 // pred_region
      %s24 = ssub.s32 5120, 5120
      %25 = vsyncadd [#allocation6], %s24
      %s26 = sshll.u32 [#allocation5], 4
      %s27 = int_to_ptr.vmem [resolvable:$true] %s26
      %32 = dma.hbm_to_vmem [thread:$0]  %s1, 5120, %s27, [#allocation6], 64, 64, 4
    $region9: #{mlp_forward.1} parent=1 // pred_fallthru
      _
    // Predicated region
    $region10: #{mlp_forward.1} parent=1 // pred_check
      _
    $region11: #{mlp_forward.1} parent=1 // pred_check_branch
      %34 = sbr.rel (0) target = $region13
    $region12: #{mlp_forward.1} parent=1 // pred_region
      %s36 = ssub.s32 3072, 3072
      %37 = vsyncadd [#allocation6], %s36
      %s38 = sshll.u32 [#allocation7], 4
      %s39 = int_to_ptr.vmem [resolvable:$true] %s38
      %44 = dma.hbm_to_vmem [thread:$0]  %s2, 3072, %s39, [#allocation6], 64, 64, 4
    $region13: #{mlp_forward.1} parent=1 // pred_fallthru
      _
    // Predicated region
    $region14: #{mlp_forward.1} parent=1 // pred_check
      _
    $region15: #{mlp_forward.1} parent=1 // pred_check_branch
      %46 = sbr.rel (0) target = $region17
    $region16: #{mlp_forward.1} parent=1 // pred_region
      _
    $region17: #{mlp_forward.1} parent=1 // pred_fallthru
      _
    // Predicated region
    $region18: #{mlp_forward.1} parent=1 // pred_check
      _
    $region19: #{mlp_forward.1} parent=1 // pred_check_branch
      %48 = sbr.rel (0) target = $region21
    $region20: #{mlp_forward.1} parent=1 // pred_region
      %49 = dma.done [#allocation4], 640
    $region21: #{mlp_forward.1} parent=1 // pred_fallthru
      _
    // Predicated region
    $region22: #{mlp_forward.1} parent=1 // pred_check
      _
    $region23: #{mlp_forward.1} parent=1 // pred_check_branch
      %51 = sbr.rel (0) target = $region25
    $region24: #{mlp_forward.1} parent=1 // pred_region
      %52 = dma.done [#allocation6], 5120
    $region25: #{mlp_forward.1} parent=1 // pred_fallthru
      _
    // Predicated region
    $region26: #{mlp_forward.1} parent=1 // pred_check
      _
    $region27: #{mlp_forward.1} parent=1 // pred_check_branch
      %54 = sbr.rel (0) target = $region29
    $region28: #{mlp_forward.1} parent=1 // pred_region
      %55 = dma.done [#allocation6], 3072
    $region29: #{mlp_forward.1} parent=1 // pred_fallthru
      _
    %57 = vst [vmem:[#allocation2] sm:$0xff] 0.0
    %58 = vst [vmem:[#allocation2 + $0x8] sm:$0xff] 0.0
    %59 = vst [vmem:[#allocation2 + $0x10] sm:$0xff] 0.0
    %60 = vst [vmem:[#allocation2 + $0x18] sm:$0xff] 0.0
    %61 = vst [vmem:[#allocation2 + $0x20] sm:$0xff] 0.0
    %v62 = vld [vmem:[#allocation3] sm:$0xff]
    %v63 = vld [vmem:[#allocation3 + $0x8] sm:$0xff]
    %v64 = vld [vmem:[#allocation3 + $0x10] sm:$0xff]
    %v65 = vld [vmem:[#allocation3 + $0x18] sm:$0xff]
    %v66 = vld [vmem:[#allocation3 + $0x20] sm:$0xff]
    %67 = vst [vmem:[#allocation2] sm:$0xff] %v62
    %68 = vst [vmem:[#allocation2 + $0x8] sm:$0xff] %v63
    %69 = vst [vmem:[#allocation2 + $0x10] sm:$0xff] %v64
    %70 = vst [vmem:[#allocation2 + $0x18] sm:$0xff] %v65
    %vm71 = vcmask 23552
    %72 = vst.msk [vmem:[#allocation2 + $0x20] sm:$0xff] %vm71, %v66
    %v73 = vld [vmem:[%s3] sm:$0xf]
    %v74 = vld [vmem:[#allocation2] sm:$0xff]
    %v75 = vld [vmem:[#allocation2 + $0x8] sm:$0xff]
    %v76 = vld [vmem:[#allocation2 + $0x10] sm:$0xff]
    %v77 = vld [vmem:[#allocation2 + $0x18] sm:$0xff]
    %v78 = vld [vmem:[#allocation2 + $0x20] sm:$0xff]
    %v79 = vpack.c.bf16 %v74, %v74
    %v80 = vpack.c.bf16 %v75, %v75
    %v81 = vpack.c.bf16 %v76, %v76
    %v82 = vpack.c.bf16 %v77, %v77
    %v83 = vpack.c.bf16 %v78, %v78
    %v84 = vld [vmem:[#allocation5] sm:$0xf]
    %v85 = vld [vmem:[#allocation5 + $0x4] sm:$0xf]
    %v86 = vld [vmem:[#allocation5 + $0x8] sm:$0xf]
    %v87 = vld [vmem:[#allocation5 + $0xc] sm:$0xf]
    %v88 = vld [vmem:[#allocation5 + $0x10] sm:$0xf]
    %v89 = vld [vmem:[#allocation5 + $0x14] sm:$0xf]
    %v90 = vld [vmem:[#allocation5 + $0x18] sm:$0xf]
    %v91 = vld [vmem:[#allocation5 + $0x1c] sm:$0xf]
    %v92 = vld [vmem:[#allocation5 + $0x20] sm:$0xf]
    %v93 = vld [vmem:[#allocation5 + $0x24] sm:$0xf]
    %v94 = vld [vmem:[#allocation5 + $0x28] sm:$0xf]
    %v95 = vld [vmem:[#allocation5 + $0x2c] sm:$0xf]
    %v96 = vld [vmem:[#allocation5 + $0x30] sm:$0xf]
    %v97 = vld [vmem:[#allocation5 + $0x34] sm:$0xf]
    %v98 = vld [vmem:[#allocation5 + $0x38] sm:$0xf]
    %v99 = vld [vmem:[#allocation5 + $0x3c] sm:$0xf]
    %v100 = vld [vmem:[#allocation5 + $0x40] sm:$0xf]
    %v101 = vld [vmem:[#allocation5 + $0x44] sm:$0xf]
    %v102 = vld [vmem:[#allocation5 + $0x48] sm:$0xf]
    %v103 = vld [vmem:[#allocation5 + $0x4c] sm:$0xf]
    %v104 = vld [vmem:[#allocation5 + $0x50] sm:$0xf]
    %v105 = vld [vmem:[#allocation5 + $0x54] sm:$0xf]
    %v106 = vld [vmem:[#allocation5 + $0x58] sm:$0xf]
    %v107 = vld [vmem:[#allocation5 + $0x5c] sm:$0xf]
    %v108 = vld [vmem:[#allocation5 + $0x60] sm:$0xf]
    %v109 = vld [vmem:[#allocation5 + $0x64] sm:$0xf]
    %v110 = vld [vmem:[#allocation5 + $0x68] sm:$0xf]
    %v111 = vld [vmem:[#allocation5 + $0x6c] sm:$0xf]
    %v112 = vld [vmem:[#allocation5 + $0x70] sm:$0xf]
    %v113 = vld [vmem:[#allocation5 + $0x74] sm:$0xf]
    %v114 = vld [vmem:[#allocation5 + $0x78] sm:$0xf]
    %v115 = vld [vmem:[#allocation5 + $0x7c] sm:$0xf]
    %v116 = vld [vmem:[#allocation5 + $0x80] sm:$0xf]
    %v117 = vld [vmem:[#allocation5 + $0x84] sm:$0xf]
    %v118 = vld [vmem:[#allocation5 + $0x88] sm:$0xf]
    %v119 = vld [vmem:[#allocation5 + $0x8c] sm:$0xf]
    %v120 = vld [vmem:[#allocation5 + $0x90] sm:$0xf]
    %v121 = vld [vmem:[#allocation5 + $0x94] sm:$0xf]
    %v122 = vld [vmem:[#allocation5 + $0x98] sm:$0xf]
    %v123 = vld [vmem:[#allocation5 + $0x9c] sm:$0xf]
    %v124 = vld [vmem:[#allocation5 + $0xa0] sm:$0xf]
    %v125 = vld [vmem:[#allocation5 + $0xa4] sm:$0xf]
    %v126 = vld [vmem:[#allocation5 + $0xa8] sm:$0xf]
    %v127 = vld [vmem:[#allocation5 + $0xac] sm:$0xf]
    %v128 = vld [vmem:[#allocation5 + $0xb0] sm:$0xf]
    %v129 = vld [vmem:[#allocation5 + $0xb4] sm:$0xf]
    %v130 = vld [vmem:[#allocation5 + $0xb8] sm:$0xf]
    %v131 = vld [vmem:[#allocation5 + $0xbc] sm:$0xf]
    %v132 = vld [vmem:[#allocation5 + $0xc0] sm:$0xf]
    %v133 = vld [vmem:[#allocation5 + $0xc4] sm:$0xf]
    %v134 = vld [vmem:[#allocation5 + $0xc8] sm:$0xf]
    %v135 = vld [vmem:[#allocation5 + $0xcc] sm:$0xf]
    %v136 = vld [vmem:[#allocation5 + $0xd0] sm:$0xf]
    %v137 = vld [vmem:[#allocation5 + $0xd4] sm:$0xf]
    %v138 = vld [vmem:[#allocation5 + $0xd8] sm:$0xf]
    %v139 = vld [vmem:[#allocation5 + $0xdc] sm:$0xf]
    %v140 = vld [vmem:[#allocation5 + $0xe0] sm:$0xf]
    %v141 = vld [vmem:[#allocation5 + $0xe4] sm:$0xf]
    %v142 = vld [vmem:[#allocation5 + $0xe8] sm:$0xf]
    %v143 = vld [vmem:[#allocation5 + $0xec] sm:$0xf]
    %v144 = vld [vmem:[#allocation5 + $0xf0] sm:$0xf]
    %v145 = vld [vmem:[#allocation5 + $0xf4] sm:$0xf]
    %v146 = vld [vmem:[#allocation5 + $0xf8] sm:$0xf]
    %v147 = vld [vmem:[#allocation5 + $0xfc] sm:$0xf]
    %v148 = vld [vmem:[#allocation5 + $0x100] sm:$0xf]
    %v149 = vld [vmem:[#allocation5 + $0x104] sm:$0xf]
    %v150 = vld [vmem:[#allocation5 + $0x108] sm:$0xf]
    %v151 = vld [vmem:[#allocation5 + $0x10c] sm:$0xf]
    %v152 = vld [vmem:[#allocation5 + $0x110] sm:$0xf]
    %v153 = vld [vmem:[#allocation5 + $0x114] sm:$0xf]
    %v154 = vld [vmem:[#allocation5 + $0x118] sm:$0xf]
    %v155 = vld [vmem:[#allocation5 + $0x11c] sm:$0xf]
    %v156 = vld [vmem:[#allocation5 + $0x120] sm:$0xf]
    %v157 = vld [vmem:[#allocation5 + $0x124] sm:$0xf]
    %v158 = vld [vmem:[#allocation5 + $0x128] sm:$0xf]
    %v159 = vld [vmem:[#allocation5 + $0x12c] sm:$0xf]
    %v160 = vld [vmem:[#allocation5 + $0x130] sm:$0xf]
    %v161 = vld [vmem:[#allocation5 + $0x134] sm:$0xf]
    %v162 = vld [vmem:[#allocation5 + $0x138] sm:$0xf]
    %v163 = vld [vmem:[#allocation5 + $0x13c] sm:$0xf]
    %v164 = vlaneseq
    %v165 = vshrl.u32 %v164, 7
    %v166 = vsub.s32 0, %v165
    %v167 = vrot.slane %v73, %v166
    %v248 = vunpack.c.l.b16 %v84
    %v249 = vunpack.c.l.b16 %v85
    %v250 = vunpack.c.l.b16 %v86
    %v251 = vunpack.c.l.b16 %v87
    %v252 = vunpack.c.l.b16 %v88
    %v253 = vunpack.c.l.b16 %v89
    %v254 = vunpack.c.l.b16 %v90
    %v255 = vunpack.c.l.b16 %v91
    %v256 = vunpack.c.l.b16 %v92
    %v257 = vunpack.c.l.b16 %v93
    %v258 = vunpack.c.l.b16 %v94
    %v259 = vunpack.c.l.b16 %v95
    %v260 = vunpack.c.l.b16 %v96
    %v261 = vunpack.c.l.b16 %v97
    %v262 = vunpack.c.l.b16 %v98
    %v263 = vunpack.c.l.b16 %v99
    %v264 = vunpack.c.l.b16 %v100
    %v265 = vunpack.c.l.b16 %v101
    %v266 = vunpack.c.l.b16 %v102
    %v267 = vunpack.c.l.b16 %v103
    %v268 = vunpack.c.l.b16 %v104
    %v269 = vunpack.c.l.b16 %v105
    %v270 = vunpack.c.l.b16 %v106
    %v271 = vunpack.c.l.b16 %v107
    %v272 = vunpack.c.l.b16 %v108
    %v273 = vunpack.c.l.b16 %v109
    %v274 = vunpack.c.l.b16 %v110
    %v275 = vunpack.c.l.b16 %v111
    %v276 = vunpack.c.l.b16 %v112
    %v277 = vunpack.c.l.b16 %v113
    %v278 = vunpack.c.l.b16 %v114
    %v279 = vunpack.c.l.b16 %v115
    %v280 = vunpack.c.l.b16 %v116
    %v281 = vunpack.c.l.b16 %v117
    %v282 = vunpack.c.l.b16 %v118
    %v283 = vunpack.c.l.b16 %v119
    %v284 = vunpack.c.l.b16 %v120
    %v285 = vunpack.c.l.b16 %v121
    %v286 = vunpack.c.l.b16 %v122
    %v287 = vunpack.c.l.b16 %v123
    %v288 = vunpack.c.l.b16 %v124
    %v289 = vunpack.c.l.b16 %v125
    %v290 = vunpack.c.l.b16 %v126
    %v291 = vunpack.c.l.b16 %v127
    %v292 = vunpack.c.l.b16 %v128
    %v293 = vunpack.c.l.b16 %v129
    %v294 = vunpack.c.l.b16 %v130
    %v295 = vunpack.c.l.b16 %v131
    %v296 = vunpack.c.l.b16 %v132
    %v297 = vunpack.c.l.b16 %v133
    %v298 = vunpack.c.l.b16 %v134
    %v299 = vunpack.c.l.b16 %v135
    %v300 = vunpack.c.l.b16 %v136
    %v301 = vunpack.c.l.b16 %v137
    %v302 = vunpack.c.l.b16 %v138
    %v303 = vunpack.c.l.b16 %v139
    %v304 = vunpack.c.l.b16 %v140
    %v305 = vunpack.c.l.b16 %v141
    %v306 = vunpack.c.l.b16 %v142
    %v307 = vunpack.c.l.b16 %v143
    %v308 = vunpack.c.l.b16 %v144
    %v309 = vunpack.c.l.b16 %v145
    %v310 = vunpack.c.l.b16 %v146
    %v311 = vunpack.c.l.b16 %v147
    %v312 = vunpack.c.l.b16 %v148
    %v313 = vunpack.c.l.b16 %v149
    %v314 = vunpack.c.l.b16 %v150
    %v315 = vunpack.c.l.b16 %v151
    %v316 = vunpack.c.l.b16 %v152
    %v317 = vunpack.c.l.b16 %v153
    %v318 = vunpack.c.l.b16 %v154
    %v319 = vunpack.c.l.b16 %v155
    %v320 = vunpack.c.l.b16 %v156
    %v321 = vunpack.c.l.b16 %v157
    %v322 = vunpack.c.l.b16 %v158
    %v323 = vunpack.c.l.b16 %v159
    %v324 = vunpack.c.l.b16 %v160
    %v325 = vunpack.c.l.b16 %v161
    %v326 = vunpack.c.l.b16 %v162
    %v327 = vunpack.c.l.b16 %v163
    %v328 = vpack.c.b16 %v249, %v248
    %v329 = vpack.c.b16 %v251, %v250
    %v330 = vpack.c.b16 %v253, %v252
    %v331 = vpack.c.b16 %v255, %v254
    %v332 = vpack.c.b16 %v257, %v256
    %v333 = vpack.c.b16 %v259, %v258
    %v334 = vpack.c.b16 %v261, %v260
    %v335 = vpack.c.b16 %v263, %v262
    %v336 = vpack.c.b16 %v265, %v264
    %v337 = vpack.c.b16 %v267, %v266
    %v338 = vpack.c.b16 %v269, %v268
    %v339 = vpack.c.b16 %v271, %v270
    %v340 = vpack.c.b16 %v273, %v272
    %v341 = vpack.c.b16 %v275, %v274
    %v342 = vpack.c.b16 %v277, %v276
    %v343 = vpack.c.b16 %v279, %v278
    %v344 = vpack.c.b16 %v281, %v280
    %v345 = vpack.c.b16 %v283, %v282
    %v346 = vpack.c.b16 %v285, %v284
    %v347 = vpack.c.b16 %v287, %v286
    %v348 = vpack.c.b16 %v289, %v288
    %v349 = vpack.c.b16 %v291, %v290
    %v350 = vpack.c.b16 %v293, %v292
    %v351 = vpack.c.b16 %v295, %v294
    %v352 = vpack.c.b16 %v297, %v296
    %v353 = vpack.c.b16 %v299, %v298
    %v354 = vpack.c.b16 %v301, %v300
    %v355 = vpack.c.b16 %v303, %v302
    %v356 = vpack.c.b16 %v305, %v304
    %v357 = vpack.c.b16 %v307, %v306
    %v358 = vpack.c.b16 %v309, %v308
    %v359 = vpack.c.b16 %v311, %v310
    %v360 = vpack.c.b16 %v313, %v312
    %v361 = vpack.c.b16 %v315, %v314
    %v362 = vpack.c.b16 %v317, %v316
    %v363 = vpack.c.b16 %v319, %v318
    %v364 = vpack.c.b16 %v321, %v320
    %v365 = vpack.c.b16 %v323, %v322
    %v366 = vpack.c.b16 %v325, %v324
    %v367 = vpack.c.b16 %v327, %v326
    %408 = vmatprep.subr.bf16.mxu0 0
    %409 = vmatpush1.bf16.msra.mxu0 %v335
    %410 = vmatprep.subr.bf16.mxu0 0
    %411 = vmatpush1.bf16.msra.mxu0 %v334
    %412 = vmatprep.subr.bf16.mxu0 0
    %413 = vmatpush1.bf16.msra.mxu0 %v333
    %414 = vmatprep.subr.bf16.mxu0 0
    %415 = vmatpush1.bf16.msra.mxu0 %v332
    %416 = vmatprep.subr.bf16.mxu0 0
    %417 = vmatpush1.bf16.msra.mxu0 %v331
    %418 = vmatprep.subr.bf16.mxu0 0
    %419 = vmatpush1.bf16.msra.mxu0 %v330
    %420 = vmatprep.subr.bf16.mxu0 0
    %421 = vmatpush1.bf16.msra.mxu0 %v329
    %422 = vmatprep.subr.bf16.mxu0 0
    %423 = vmatpush1.bf16.msra.mxu0 %v328
    %424 = vmatprep.subr.bf16.mxu0 0
    %425 = vmatpush2.bf16.msra.mxu0 %v343
    %426 = vmatprep.subr.bf16.mxu0 0
    %427 = vmatpush2.bf16.msra.mxu0 %v342
    %428 = vmatprep.subr.bf16.mxu0 0
    %429 = vmatpush2.bf16.msra.mxu0 %v341
    %430 = vmatprep.subr.bf16.mxu0 0
    %431 = vmatpush2.bf16.msra.mxu0 %v340
    %432 = vmatprep.subr.bf16.mxu0 0
    %433 = vmatpush2.bf16.msra.mxu0 %v339
    %434 = vmatprep.subr.bf16.mxu0 0
    %435 = vmatpush2.bf16.msra.mxu0 %v338
    %436 = vmatprep.subr.bf16.mxu0 0
    %437 = vmatpush2.bf16.msra.mxu0 %v337
    %438 = vmatprep.subr.bf16.mxu0 0
    %439 = vmatpush2.bf16.msra.mxu0 %v336
    %440 = vmatprep.mubr.bf16.mxu0 %v80
    %441 = vmatmul.mubr.bf16.gmra.mxu0 %v79
    %v442 = vpop.f32.mrf.mxu0
    %v443 = vadd.f32 %v167, %v442
    %v444 = vpop.f32.mrf.mxu0
    %v445 = vpop.f32.mrf.mxu0
    %v446 = vpop.f32.mrf.mxu0
    %447 = vdwg.mxu0
    %448 = vmatprep.subr.bf16.mxu0 0
    %449 = vmatpush1.bf16.msra.mxu0 %v351
    %450 = vmatprep.subr.bf16.mxu0 0
    %451 = vmatpush1.bf16.msra.mxu0 %v350
    %452 = vmatprep.subr.bf16.mxu0 0
    %453 = vmatpush1.bf16.msra.mxu0 %v349
    %454 = vmatprep.subr.bf16.mxu0 0
    %455 = vmatpush1.bf16.msra.mxu0 %v348
    %456 = vmatprep.subr.bf16.mxu0 0
    %457 = vmatpush1.bf16.msra.mxu0 %v347
    %458 = vmatprep.subr.bf16.mxu0 0
    %459 = vmatpush1.bf16.msra.mxu0 %v346
    %460 = vmatprep.subr.bf16.mxu0 0
    %461 = vmatpush1.bf16.msra.mxu0 %v345
    %462 = vmatprep.subr.bf16.mxu0 0
    %463 = vmatpush1.bf16.msra.mxu0 %v344
    %464 = vmatprep.subr.bf16.mxu0 0
    %465 = vmatpush2.bf16.msra.mxu0 %v359
    %466 = vmatprep.subr.bf16.mxu0 0
    %467 = vmatpush2.bf16.msra.mxu0 %v358
    %468 = vmatprep.subr.bf16.mxu0 0
    %469 = vmatpush2.bf16.msra.mxu0 %v357
    %470 = vmatprep.subr.bf16.mxu0 0
    %471 = vmatpush2.bf16.msra.mxu0 %v356
    %472 = vmatprep.subr.bf16.mxu0 0
    %473 = vmatpush2.bf16.msra.mxu0 %v355
    %474 = vmatprep.subr.bf16.mxu0 0
    %475 = vmatpush2.bf16.msra.mxu0 %v354
    %476 = vmatprep.subr.bf16.mxu0 0
    %477 = vmatpush2.bf16.msra.mxu0 %v353
    %478 = vmatprep.subr.bf16.mxu0 0
    %479 = vmatpush2.bf16.msra.mxu0 %v352
    %480 = vmatprep.mubr.bf16.mxu0 %v82
    %481 = vmatmul.mubr.bf16.gmra.mxu0 %v81
    %v482 = vpop.f32.mrf.mxu0
    %v483 = vadd.f32 %v443, %v482
    %v484 = vpop.f32.mrf.mxu0
    %v485 = vpop.f32.mrf.mxu0
    %v486 = vpop.f32.mrf.mxu0
    %487 = vdwg.mxu0
    %488 = vmatprep.subr.bf16.mxu0 0
    %489 = vmatpush1.bf16.msra.mxu0 %v367
    %490 = vmatprep.subr.bf16.mxu0 0
    %491 = vmatpush1.bf16.msra.mxu0 %v366
    %492 = vmatprep.subr.bf16.mxu0 0
    %493 = vmatpush1.bf16.msra.mxu0 %v365
    %494 = vmatprep.subr.bf16.mxu0 0
    %495 = vmatpush1.bf16.msra.mxu0 %v364
    %496 = vmatprep.subr.bf16.mxu0 0
    %497 = vmatpush1.bf16.msra.mxu0 %v363
    %498 = vmatprep.subr.bf16.mxu0 0
    %499 = vmatpush1.bf16.msra.mxu0 %v362
    %500 = vmatprep.subr.bf16.mxu0 0
    %501 = vmatpush1.bf16.msra.mxu0 %v361
    %502 = vmatprep.subr.bf16.mxu0 0
    %503 = vmatpush1.bf16.msra.mxu0 %v360
    %504 = vmatprep.subr.bf16.mxu0 0
    %505 = vmatpush2.bf16.msra.mxu0 0
    %506 = vmatprep.subr.bf16.mxu0 0
    %507 = vmatpush2.bf16.msra.mxu0 0
    %508 = vmatprep.subr.bf16.mxu0 0
    %509 = vmatpush2.bf16.msra.mxu0 0
    %510 = vmatprep.subr.bf16.mxu0 0
    %511 = vmatpush2.bf16.msra.mxu0 0
    %512 = vmatprep.subr.bf16.mxu0 0
    %513 = vmatpush2.bf16.msra.mxu0 0
    %514 = vmatprep.subr.bf16.mxu0 0
    %515 = vmatpush2.bf16.msra.mxu0 0
    %516 = vmatprep.subr.bf16.mxu0 0
    %517 = vmatpush2.bf16.msra.mxu0 0
    %518 = vmatprep.subr.bf16.mxu0 0
    %519 = vmatpush2.bf16.msra.mxu0 0
    %520 = vmatprep.mubr.bf16.mxu0 0
    %521 = vmatmul.mubr.bf16.gmra.mxu0 %v83
    %v522 = vpop.f32.mrf.mxu0
    %v523 = vadd.f32 %v483, %v522
    %v524 = vpop.f32.mrf.mxu0
    %v525 = vpop.f32.mrf.mxu0
    %v526 = vpop.f32.mrf.mxu0
    %527 = vdwg.mxu0
    %v528 = vmax.f32 %v523, 0.0
    %v529 = vpack.c.bf16 %v528, %v528
    %v530 = vld [vmem:[#allocation7] sm:$0xf]
    %v531 = vld [vmem:[#allocation7 + $0x4] sm:$0xf]
    %v532 = vld [vmem:[#allocation7 + $0x8] sm:$0xf]
    %v533 = vld [vmem:[#allocation7 + $0xc] sm:$0xf]
    %v534 = vld [vmem:[#allocation7 + $0x10] sm:$0xf]
    %v535 = vld [vmem:[#allocation7 + $0x14] sm:$0xf]
    %v536 = vld [vmem:[#allocation7 + $0x18] sm:$0xf]
    %v537 = vld [vmem:[#allocation7 + $0x1c] sm:$0xf]
    %v538 = vld [vmem:[#allocation7 + $0x20] sm:$0xf]
    %v539 = vld [vmem:[#allocation7 + $0x24] sm:$0xf]
    %v540 = vld [vmem:[#allocation7 + $0x28] sm:$0xf]
    %v541 = vld [vmem:[#allocation7 + $0x2c] sm:$0xf]
    %v542 = vld [vmem:[#allocation7 + $0x30] sm:$0xf]
    %v543 = vld [vmem:[#allocation7 + $0x34] sm:$0xf]
    %v544 = vld [vmem:[#allocation7 + $0x38] sm:$0xf]
    %v545 = vld [vmem:[#allocation7 + $0x3c] sm:$0xf]
    %v546 = vlaneseq
    %v547 = vshrl.u32 %v546, 7
    %v548 = vsub.s32 1, %v547
    %v549 = vrot.slane %v73, %v548
    %v566 = vunpack.c.l.b16 %v530
    %v567 = vunpack.c.l.b16 %v531
    %v568 = vunpack.c.l.b16 %v532
    %v569 = vunpack.c.l.b16 %v533
    %v570 = vunpack.c.l.b16 %v534
    %v571 = vunpack.c.l.b16 %v535
    %v572 = vunpack.c.l.b16 %v536
    %v573 = vunpack.c.l.b16 %v537
    %v574 = vunpack.c.l.b16 %v538
    %v575 = vunpack.c.l.b16 %v539
    %v576 = vunpack.c.l.b16 %v540
    %v577 = vunpack.c.l.b16 %v541
    %v578 = vunpack.c.l.b16 %v542
    %v579 = vunpack.c.l.b16 %v543
    %v580 = vunpack.c.l.b16 %v544
    %v581 = vunpack.c.l.b16 %v545
    %v582 = vpack.c.b16 %v567, %v566
    %v583 = vpack.c.b16 %v569, %v568
    %v584 = vpack.c.b16 %v571, %v570
    %v585 = vpack.c.b16 %v573, %v572
    %v586 = vpack.c.b16 %v575, %v574
    %v587 = vpack.c.b16 %v577, %v576
    %v588 = vpack.c.b16 %v579, %v578
    %v589 = vpack.c.b16 %v581, %v580
    %598 = vmatprep.subr.bf16.mxu0 0
    %599 = vmatpush1.bf16.msra.mxu0 %v589
    %600 = vmatprep.subr.bf16.mxu0 0
    %601 = vmatpush1.bf16.msra.mxu0 %v588
    %602 = vmatprep.subr.bf16.mxu0 0
    %603 = vmatpush1.bf16.msra.mxu0 %v587
    %604 = vmatprep.subr.bf16.mxu0 0
    %605 = vmatpush1.bf16.msra.mxu0 %v586
    %606 = vmatprep.subr.bf16.mxu0 0
    %607 = vmatpush1.bf16.msra.mxu0 %v585
    %608 = vmatprep.subr.bf16.mxu0 0
    %609 = vmatpush1.bf16.msra.mxu0 %v584
    %610 = vmatprep.subr.bf16.mxu0 0
    %611 = vmatpush1.bf16.msra.mxu0 %v583
    %612 = vmatprep.subr.bf16.mxu0 0
    %613 = vmatpush1.bf16.msra.mxu0 %v582
    %614 = vmatprep.subr.bf16.mxu0 0
    %615 = vmatpush2.bf16.msra.mxu0 0
    %616 = vmatprep.subr.bf16.mxu0 0
    %617 = vmatpush2.bf16.msra.mxu0 0
    %618 = vmatprep.subr.bf16.mxu0 0
    %619 = vmatpush2.bf16.msra.mxu0 0
    %620 = vmatprep.subr.bf16.mxu0 0
    %621 = vmatpush2.bf16.msra.mxu0 0
    %622 = vmatprep.subr.bf16.mxu0 0
    %623 = vmatpush2.bf16.msra.mxu0 0
    %624 = vmatprep.subr.bf16.mxu0 0
    %625 = vmatpush2.bf16.msra.mxu0 0
    %626 = vmatprep.subr.bf16.mxu0 0
    %627 = vmatpush2.bf16.msra.mxu0 0
    %628 = vmatprep.subr.bf16.mxu0 0
    %629 = vmatpush2.bf16.msra.mxu0 0
    %630 = vmatprep.mubr.bf16.mxu0 0
    %631 = vmatmul.mubr.bf16.gmra.mxu0 %v529
    %v632 = vpop.f32.mrf.mxu0
    %v633 = vadd.f32 %v549, %v632
    %v634 = vpop.f32.mrf.mxu0
    %v635 = vpop.f32.mrf.mxu0
    %v636 = vpop.f32.mrf.mxu0
    %637 = vdwg.mxu0
    %v638 = vmax.f32 %v633, 0.0
    %v639 = vpack.c.bf16 %v638, %v638
    %s640 = scalar_lea.vmem [#allocation7], 64
    %v641 = vld [vmem:[%s640] sm:$0xf]
    %v642 = vld [vmem:[%s640 + $0x4] sm:$0xf]
    %v643 = vld [vmem:[%s640 + $0x8] sm:$0xf]
    %v644 = vld [vmem:[%s640 + $0xc] sm:$0xf]
    %v645 = vld [vmem:[%s640 + $0x10] sm:$0xf]
    %v646 = vld [vmem:[%s640 + $0x14] sm:$0xf]
    %v647 = vld [vmem:[%s640 + $0x18] sm:$0xf]
    %v648 = vld [vmem:[%s640 + $0x1c] sm:$0xf]
    %v649 = vld [vmem:[%s640 + $0x20] sm:$0xf]
    %v650 = vld [vmem:[%s640 + $0x24] sm:$0xf]
    %v651 = vld [vmem:[%s640 + $0x28] sm:$0xf]
    %v652 = vld [vmem:[%s640 + $0x2c] sm:$0xf]
    %v653 = vld [vmem:[%s640 + $0x30] sm:$0xf]
    %v654 = vld [vmem:[%s640 + $0x34] sm:$0xf]
    %v655 = vld [vmem:[%s640 + $0x38] sm:$0xf]
    %v656 = vld [vmem:[%s640 + $0x3c] sm:$0xf]
    %v657 = vlaneseq
    %v658 = vshrl.u32 %v657, 7
    %v659 = vsub.s32 2, %v658
    %v660 = vrot.slane %v73, %v659
    %v677 = vunpack.c.l.b16 %v641
    %v678 = vunpack.c.l.b16 %v642
    %v679 = vunpack.c.l.b16 %v643
    %v680 = vunpack.c.l.b16 %v644
    %v681 = vunpack.c.l.b16 %v645
    %v682 = vunpack.c.l.b16 %v646
    %v683 = vunpack.c.l.b16 %v647
    %v684 = vunpack.c.l.b16 %v648
    %v685 = vunpack.c.l.b16 %v649
    %v686 = vunpack.c.l.b16 %v650
    %v687 = vunpack.c.l.b16 %v651
    %v688 = vunpack.c.l.b16 %v652
    %v689 = vunpack.c.l.b16 %v653
    %v690 = vunpack.c.l.b16 %v654
    %v691 = vunpack.c.l.b16 %v655
    %v692 = vunpack.c.l.b16 %v656
    %v693 = vpack.c.b16 %v678, %v677
    %v694 = vpack.c.b16 %v680, %v679
    %v695 = vpack.c.b16 %v682, %v681
    %v696 = vpack.c.b16 %v684, %v683
    %v697 = vpack.c.b16 %v686, %v685
    %v698 = vpack.c.b16 %v688, %v687
    %v699 = vpack.c.b16 %v690, %v689
    %v700 = vpack.c.b16 %v692, %v691
    %709 = vmatprep.subr.bf16.mxu0 0
    %710 = vmatpush1.bf16.msra.mxu0 %v700
    %711 = vmatprep.subr.bf16.mxu0 0
    %712 = vmatpush1.bf16.msra.mxu0 %v699
    %713 = vmatprep.subr.bf16.mxu0 0
    %714 = vmatpush1.bf16.msra.mxu0 %v698
    %715 = vmatprep.subr.bf16.mxu0 0
    %716 = vmatpush1.bf16.msra.mxu0 %v697
    %717 = vmatprep.subr.bf16.mxu0 0
    %718 = vmatpush1.bf16.msra.mxu0 %v696
    %719 = vmatprep.subr.bf16.mxu0 0
    %720 = vmatpush1.bf16.msra.mxu0 %v695
    %721 = vmatprep.subr.bf16.mxu0 0
    %722 = vmatpush1.bf16.msra.mxu0 %v694
    %723 = vmatprep.subr.bf16.mxu0 0
    %724 = vmatpush1.bf16.msra.mxu0 %v693
    %725 = vmatprep.subr.bf16.mxu0 0
    %726 = vmatpush2.bf16.msra.mxu0 0
    %727 = vmatprep.subr.bf16.mxu0 0
    %728 = vmatpush2.bf16.msra.mxu0 0
    %729 = vmatprep.subr.bf16.mxu0 0
    %730 = vmatpush2.bf16.msra.mxu0 0
    %731 = vmatprep.subr.bf16.mxu0 0
    %732 = vmatpush2.bf16.msra.mxu0 0
    %733 = vmatprep.subr.bf16.mxu0 0
    %734 = vmatpush2.bf16.msra.mxu0 0
    %735 = vmatprep.subr.bf16.mxu0 0
    %736 = vmatpush2.bf16.msra.mxu0 0
    %737 = vmatprep.subr.bf16.mxu0 0
    %738 = vmatpush2.bf16.msra.mxu0 0
    %739 = vmatprep.subr.bf16.mxu0 0
    %740 = vmatpush2.bf16.msra.mxu0 0
    %741 = vmatprep.mubr.bf16.mxu0 0
    %742 = vmatmul.mubr.bf16.gmra.mxu0 %v639
    %v743 = vpop.f32.mrf.mxu0
    %v744 = vadd.f32 %v660, %v743
    %v745 = vpop.f32.mrf.mxu0
    %v746 = vpop.f32.mrf.mxu0
    %v747 = vpop.f32.mrf.mxu0
    %748 = vdwg.mxu0
    %v749 = vmax.f32 %v744, 0.0
    %v750 = vpack.c.bf16 %v749, %v749
    %s751 = scalar_lea.vmem [#allocation7], 128
    %v752 = vld [vmem:[%s751] sm:$0xf]
    %v753 = vld [vmem:[%s751 + $0x4] sm:$0xf]
    %v754 = vld [vmem:[%s751 + $0x8] sm:$0xf]
    %v755 = vld [vmem:[%s751 + $0xc] sm:$0xf]
    %v756 = vld [vmem:[%s751 + $0x10] sm:$0xf]
    %v757 = vld [vmem:[%s751 + $0x14] sm:$0xf]
    %v758 = vld [vmem:[%s751 + $0x18] sm:$0xf]
    %v759 = vld [vmem:[%s751 + $0x1c] sm:$0xf]
    %v760 = vld [vmem:[%s751 + $0x20] sm:$0xf]
    %v761 = vld [vmem:[%s751 + $0x24] sm:$0xf]
    %v762 = vld [vmem:[%s751 + $0x28] sm:$0xf]
    %v763 = vld [vmem:[%s751 + $0x2c] sm:$0xf]
    %v764 = vld [vmem:[%s751 + $0x30] sm:$0xf]
    %v765 = vld [vmem:[%s751 + $0x34] sm:$0xf]
    %v766 = vld [vmem:[%s751 + $0x38] sm:$0xf]
    %v767 = vld [vmem:[%s751 + $0x3c] sm:$0xf]
    %v768 = vlaneseq
    %v769 = vshrl.u32 %v768, 7
    %v770 = vsub.s32 3, %v769
    %v771 = vrot.slane %v73, %v770
    %v788 = vunpack.c.l.b16 %v752
    %v789 = vunpack.c.l.b16 %v753
    %v790 = vunpack.c.l.b16 %v754
    %v791 = vunpack.c.l.b16 %v755
    %v792 = vunpack.c.l.b16 %v756
    %v793 = vunpack.c.l.b16 %v757
    %v794 = vunpack.c.l.b16 %v758
    %v795 = vunpack.c.l.b16 %v759
    %v796 = vunpack.c.l.b16 %v760
    %v797 = vunpack.c.l.b16 %v761
    %v798 = vunpack.c.l.b16 %v762
    %v799 = vunpack.c.l.b16 %v763
    %v800 = vunpack.c.l.b16 %v764
    %v801 = vunpack.c.l.b16 %v765
    %v802 = vunpack.c.l.b16 %v766
    %v803 = vunpack.c.l.b16 %v767
    %v804 = vpack.c.b16 %v789, %v788
    %v805 = vpack.c.b16 %v791, %v790
    %v806 = vpack.c.b16 %v793, %v792
    %v807 = vpack.c.b16 %v795, %v794
    %v808 = vpack.c.b16 %v797, %v796
    %v809 = vpack.c.b16 %v799, %v798
    %v810 = vpack.c.b16 %v801, %v800
    %v811 = vpack.c.b16 %v803, %v802
    %820 = vmatprep.subr.bf16.mxu0 0
    %821 = vmatpush1.bf16.msra.mxu0 %v811
    %822 = vmatprep.subr.bf16.mxu0 0
    %823 = vmatpush1.bf16.msra.mxu0 %v810
    %824 = vmatprep.subr.bf16.mxu0 0
    %825 = vmatpush1.bf16.msra.mxu0 %v809
    %826 = vmatprep.subr.bf16.mxu0 0
    %827 = vmatpush1.bf16.msra.mxu0 %v808
    %828 = vmatprep.subr.bf16.mxu0 0
    %829 = vmatpush1.bf16.msra.mxu0 %v807
    %830 = vmatprep.subr.bf16.mxu0 0
    %831 = vmatpush1.bf16.msra.mxu0 %v806
    %832 = vmatprep.subr.bf16.mxu0 0
    %833 = vmatpush1.bf16.msra.mxu0 %v805
    %834 = vmatprep.subr.bf16.mxu0 0
    %835 = vmatpush1.bf16.msra.mxu0 %v804
    %836 = vmatprep.subr.bf16.mxu0 0
    %837 = vmatpush2.bf16.msra.mxu0 0
    %838 = vmatprep.subr.bf16.mxu0 0
    %839 = vmatpush2.bf16.msra.mxu0 0
    %840 = vmatprep.subr.bf16.mxu0 0
    %841 = vmatpush2.bf16.msra.mxu0 0
    %842 = vmatprep.subr.bf16.mxu0 0
    %843 = vmatpush2.bf16.msra.mxu0 0
    %844 = vmatprep.subr.bf16.mxu0 0
    %845 = vmatpush2.bf16.msra.mxu0 0
    %846 = vmatprep.subr.bf16.mxu0 0
    %847 = vmatpush2.bf16.msra.mxu0 0
    %848 = vmatprep.subr.bf16.mxu0 0
    %849 = vmatpush2.bf16.msra.mxu0 0
    %850 = vmatprep.subr.bf16.mxu0 0
    %851 = vmatpush2.bf16.msra.mxu0 0
    %852 = vmatprep.mubr.bf16.mxu0 0
    %853 = vmatmul.mubr.bf16.gmra.mxu0 %v750
    %v854 = vpop.f32.mrf.mxu0
    %v855 = vadd.f32 %v771, %v854
    %v856 = vpop.f32.mrf.mxu0
    %v857 = vpop.f32.mrf.mxu0
    %v858 = vpop.f32.mrf.mxu0
    %859 = vdwg.mxu0
    %860 = vst [vmem:[%s4] sm:$0xff] %v855
    // Predicated region
    $region30: #{mlp_forward.1} parent=1 // pred_check
      _
    $region31: #{mlp_forward.1} parent=1 // pred_check_branch
      %862 = sbr.rel (0) target = $region33
    $region32: #{mlp_forward.1} parent=1 // pred_region
      _
    $region33: #{mlp_forward.1} parent=1 // pred_fallthru
      _
    // Predicated region
    $region34: #{mlp_forward.1} parent=1 // pred_check
      _
    $region35: #{mlp_forward.1} parent=1 // pred_check_branch
      %864 = sbr.rel (0) target = $region37
    $region36: #{mlp_forward.1} parent=1 // pred_region
      _
    $region37: #{mlp_forward.1} parent=1 // pred_fallthru
      _
    %865 = vsyncpa [#allocation4], 1
    %866 = vsyncpa [#allocation6], 1

</llo_original>
